<compile_context>
chip_gen: v7x
topology: tpu7x:2x2x1
jax: 0.10.0
libtpu: 0.0.40
codegen_flags: <defaults>
</compile_context>

<pallas_src>
import functools
import math

import jax
import jax.numpy as jnp
from jax.experimental import pallas as pl
from jax.experimental.pallas import tpu as pltpu


# --------------------------------------------------------------------------- #
# Helpers
# --------------------------------------------------------------------------- #

def _round_up(n, m):
    return ((n + m - 1) // m) * m


def _vmem_limit_bytes():
    # ~75% of physical VMEM (v5e/v6e: 96 MiB, v7x: 48 MiB), capped at 100 MiB.
    try:
        cap = int(pltpu.get_tpu_info().vmem_capacity_bytes)
    except Exception:
        cap = 64 * 1024 * 1024
    return min(int(cap * 3 // 4), 100 * 1024 * 1024)


_VMEM_LIMIT = _vmem_limit_bytes()


def _cparams(sem):
    return pltpu.CompilerParams(dimension_semantics=sem,
                                vmem_limit_bytes=_VMEM_LIMIT)


def _ff_tile(dim_ff, cap=512):
    """Largest multiple of 128 <= cap that divides dim_ff (else full residency)."""
    if dim_ff <= cap:
        return dim_ff
    t = (cap // 128) * 128
    while t >= 128:
        if dim_ff % t == 0:
            return t
        t -= 128
    return dim_ff


def _layernorm_f32(x, g, b, eps):
    xf = x.astype(jnp.float32)
    mu = jnp.mean(xf, axis=-1, keepdims=True)
    d = xf - mu
    var = jnp.mean(d * d, axis=-1, keepdims=True)
    return d * jax.lax.rsqrt(var + eps) * g + b


def _pad_rows(x, mp):
    return x if x.shape[0] == mp else jnp.pad(x, ((0, mp - x.shape[0]), (0, 0)))


# --------------------------------------------------------------------------- #
# Kernels
# --------------------------------------------------------------------------- #

def _layernorm_kernel(x_ref, g_ref, b_ref, o_ref, *, eps):
    o_ref[...] = _layernorm_f32(x_ref[...], g_ref[...], b_ref[...], eps
                                ).astype(o_ref.dtype)


def _ln_linear_kernel(*refs, eps, fuse_ln):
    # Optional fused pre-norm (f32 math), then bf16 x bf16 -> f32 matmul + bias.
    if fuse_ln:
        x_ref, g_ref, b_ref, w_ref, bias_ref, o_ref = refs
        xop = _layernorm_f32(x_ref[...], g_ref[...], b_ref[...], eps
                             ).astype(jnp.bfloat16)
    else:
        x_ref, w_ref, bias_ref, o_ref = refs
        xop = x_ref[...]
    acc = jnp.dot(xop, w_ref[...], preferred_element_type=jnp.float32)
    o_ref[...] = (acc + bias_ref[...]).astype(o_ref.dtype)


def _proj_residual_kernel(x_ref, res_ref, w_ref, bias_ref, o_ref):
    # out = residual + x @ W + b   (residual add kept in f32)
    acc = jnp.dot(x_ref[...], w_ref[...], preferred_element_type=jnp.float32)
    o_ref[...] = (res_ref[...].astype(jnp.float32) + acc + bias_ref[...]
                  ).astype(o_ref.dtype)


def _ffn_kernel(x_ref, g_ref, b_ref, w1_ref, b1_ref, w2_ref, b2_ref, o_ref,
                h_sc, acc_sc, *, eps, activation):
    # Fused pre-norm FFN sub-layer with dim_ff K-tiling:
    #   out = x + act(LN(x) @ W1 + b1) @ W2 + b2
    j = pl.program_id(1)

    @pl.when(j == 0)
    def _():
        h_sc[...] = _layernorm_f32(x_ref[...], g_ref[...], b_ref[...], eps
                                   ).astype(jnp.bfloat16)
        acc_sc[...] = jnp.zeros_like(acc_sc)

    a = jnp.dot(h_sc[...], w1_ref[...], preferred_element_type=jnp.float32)
    a = a + b1_ref[...]
    if activation == "relu":
        a = jnp.maximum(a, 0.0)
    else:
        a = jax.nn.gelu(a)
    acc_sc[...] += jnp.dot(a.astype(jnp.bfloat16), w2_ref[...],
                           preferred_element_type=jnp.float32)

    @pl.when(j == pl.num_programs(1) - 1)
    def _():
        o_ref[...] = (x_ref[...].astype(jnp.float32) + acc_sc[...] + b2_ref[...]
                      ).astype(o_ref.dtype)


def _attn_heads(q, kv, bias, o_ref, *, scale, n_heads):
    # q: (Lq, D) bf16, kv: (Lk, 2D) bf16, bias: (Lq, Lk) f32 or None.
    # Per-head matmuls (bf16 operands, f32 accum), lane-dense concat-order store.
    D = q.shape[-1]
    hd = D // n_heads
    k = kv[:, :D]
    v = kv[:, D:]
    ctx = []
    for h in range(n_heads):
        sl = slice(h * hd, (h + 1) * hd)
        qh, kh, vh = q[:, sl], k[:, sl], v[:, sl]
        s = jax.lax.dot_general(qh, kh, (((1,), (1,)), ((), ())),
                                preferred_element_type=jnp.float32) * scale
        if bias is not None:
            s = s + bias
        s = s - jnp.max(s, axis=-1, keepdims=True)
        p = jnp.exp(s)
        p = p * pl.reciprocal(jnp.sum(p, axis=-1, keepdims=True), approx=True)
        ctx.append(jnp.dot(p.astype(vh.dtype), vh,
                           preferred_element_type=jnp.float32))
    o_ref[...] = jnp.concatenate(ctx, axis=-1).astype(o_ref.dtype)


def _self_attn_kernel(*refs, scale, n_heads, has_bias):
    if has_bias:
        qkv_ref, bias_ref, o_ref = refs
        bias = bias_ref[...]
    else:
        qkv_ref, o_ref = refs
        bias = None
    D = o_ref.shape[-1]
    qkv = qkv_ref[...]
    _attn_heads(qkv[:, :D], qkv[:, D:], bias, o_ref, scale=scale, n_heads=n_heads)


def _cross_attn_kernel(*refs, scale, n_heads, has_bias):
    if has_bias:
        q_ref, kv_ref, bias_ref, o_ref = refs
        bias = bias_ref[...]
    else:
        q_ref, kv_ref, o_ref = refs
        bias = None
    _attn_heads(q_ref[...], kv_ref[...], bias, o_ref, scale=scale, n_heads=n_heads)


# --------------------------------------------------------------------------- #
# Pallas wrappers
# --------------------------------------------------------------------------- #

def layernorm(x2d, g, b, eps, *, tm=256):
    M, D = x2d.shape
    Mp = _round_up(M, 8)
    tm_eff = min(tm, Mp)
    xp = _pad_rows(x2d, Mp)
    out = pl.pallas_call(
        functools.partial(_layernorm_kernel, eps=float(eps)),
        out_shape=jax.ShapeDtypeStruct((Mp, D), jnp.float32),
        grid=(pl.cdiv(Mp, tm_eff),),
        in_specs=[pl.BlockSpec((tm_eff, D), lambda i: (i, 0)),
                  pl.BlockSpec((1, D), lambda i: (0, 0)),
                  pl.BlockSpec((1, D), lambda i: (0, 0))],
        out_specs=pl.BlockSpec((tm_eff, D), lambda i: (i, 0)),
        compiler_params=_cparams(("parallel",)),
    )(xp, g.reshape(1, D), b.reshape(1, D))
    return out if Mp == M else out[:M]


def ln_linear(x2d, w, b, norm=None, *, eps=1e-6, tm=256, out_dtype=jnp.bfloat16):
    """out = (LN(x) if norm else x) @ W + b, bf16 MXU operands, bf16 output."""
    M, K = x2d.shape
    N = w.shape[1]
    Mp = _round_up(M, 8)
    tm_eff = min(tm, Mp)           # TODO(synk): on v5e prefer tm=128
    xp = _pad_rows(x2d, Mp)
    fuse_ln = norm is not None
    x_spec = pl.BlockSpec((tm_eff, K), lambda i: (i, 0))
    w_spec = pl.BlockSpec((K, N), lambda i: (0, 0))
    bias_spec = pl.BlockSpec((1, N), lambda i: (0, 0))
    if fuse_ln:
        g, beta = norm
        in_specs = [x_spec, pl.BlockSpec((1, K), lambda i: (0, 0)),
                    pl.BlockSpec((1, K), lambda i: (0, 0)), w_spec, bias_spec]
        args = (xp, g.reshape(1, K), beta.reshape(1, K), w, b.reshape(1, N))
    else:
        in_specs = [x_spec, w_spec, bias_spec]
        args = (xp, w, b.reshape(1, N))
    cost = pl.CostEstimate(
        flops=int(2 * Mp * K * N), transcendentals=0,
        bytes_accessed=int(Mp * K * xp.dtype.itemsize + K * N * 2 + N * 4 + Mp * N * 2))
    out = pl.pallas_call(
        functools.partial(_ln_linear_kernel, eps=float(eps), fuse_ln=fuse_ln),
        out_shape=jax.ShapeDtypeStruct((Mp, N), out_dtype),
        grid=(pl.cdiv(Mp, tm_eff),),
        in_specs=in_specs,
        out_specs=pl.BlockSpec((tm_eff, N), lambda i: (i, 0)),
        compiler_params=_cparams(("parallel",)),
        cost_estimate=cost,
    )(*args)
    return out if Mp == M else out[:M]


def proj_residual(x2d, res2d, w, b, *, tm=256):
    """out = residual + x @ W + b  (f32 residual stream output)."""
    M, K = x2d.shape
    N = w.shape[1]
    Mp = _round_up(M, 8)
    tm_eff = min(tm, Mp)
    xp = _pad_rows(x2d, Mp)
    rp = _pad_rows(res2d, Mp)
    cost = pl.CostEstimate(
        flops=int(2 * Mp * K * N), transcendentals=0,
        bytes_accessed=int(Mp * K * 2 + Mp * N * 4 + K * N * 2 + N * 4 + Mp * N * 4))
    out = pl.pallas_call(
        _proj_residual_kernel,
        out_shape=jax.ShapeDtypeStruct((Mp, N), jnp.float32),
        grid=(pl.cdiv(Mp, tm_eff),),
        in_specs=[pl.BlockSpec((tm_eff, K), lambda i: (i, 0)),
                  pl.BlockSpec((tm_eff, N), lambda i: (i, 0)),
                  pl.BlockSpec((K, N), lambda i: (0, 0)),
                  pl.BlockSpec((1, N), lambda i: (0, 0))],
        out_specs=pl.BlockSpec((tm_eff, N), lambda i: (i, 0)),
        compiler_params=_cparams(("parallel",)),
        cost_estimate=cost,
    )(xp, rp, w, b.reshape(1, N))
    return out if Mp == M else out[:M]


def ffn_residual(x2d, norm, w1, b1, w2, b2, *, eps=1e-6, tm=256, tff_cap=512,
                 activation="relu"):
    """out = x + act(LN(x) @ W1 + b1) @ W2 + b2, dim_ff streamed in tiles."""
    M, D = x2d.shape
    F = w1.shape[1]
    Mp = _round_up(M, 8)
    tm_eff = min(tm, Mp)
    tff = _ff_tile(F, tff_cap)
    xp = _pad_rows(x2d, Mp)
    g, beta = norm
    cost = pl.CostEstimate(
        flops=int(4 * Mp * D * F), transcendentals=0,
        bytes_accessed=int(Mp * D * 4 + 2 * D * F * 2 + (F + D) * 4 + Mp * D * 4))
    out = pl.pallas_call(
        functools.partial(_ffn_kernel, eps=float(eps), activation=activation),
        out_shape=jax.ShapeDtypeStruct((Mp, D), jnp.float32),
        grid=(pl.cdiv(Mp, tm_eff), F // tff),
        in_specs=[pl.BlockSpec((tm_eff, D), lambda i, j: (i, 0)),   # x (residual + LN in)
                  pl.BlockSpec((1, D), lambda i, j: (0, 0)),        # gamma
                  pl.BlockSpec((1, D), lambda i, j: (0, 0)),        # beta
                  pl.BlockSpec((D, tff), lambda i, j: (0, j)),      # W1 tile
                  pl.BlockSpec((1, tff), lambda i, j: (0, j)),      # b1 tile
                  pl.BlockSpec((tff, D), lambda i, j: (j, 0)),      # W2 tile
                  pl.BlockSpec((1, D), lambda i, j: (0, 0))],       # b2
        out_specs=pl.BlockSpec((tm_eff, D), lambda i, j: (i, 0)),
        scratch_shapes=[pltpu.VMEM((tm_eff, D), jnp.bfloat16),      # LN(x) in bf16
                        pltpu.VMEM((tm_eff, D), jnp.float32)],      # f32 accumulator
        compiler_params=_cparams(("parallel", "arbitrary")),
        cost_estimate=cost,
    )(xp, g.reshape(1, D), beta.reshape(1, D), w1, b1.reshape(1, F), w2,
      b2.reshape(1, D))
    return out if Mp == M else out[:M]


def self_attention(qkv3d, bias, *, n_heads, scale):
    """qkv3d: (B, L, 3D) bf16 packed [q|k|v]; bias: (B, L, L) f32 additive or None."""
    B, L, threeD = qkv3d.shape
    D = threeD // 3
    has_bias = bias is not None
    in_specs = [pl.BlockSpec((None, L, threeD), lambda b: (b, 0, 0))]
    args = [qkv3d]
    if has_bias:
        in_specs.append(pl.BlockSpec((None, L, bias.shape[-1]), lambda b: (b, 0, 0)))
        args.append(bias)
    return pl.pallas_call(
        functools.partial(_self_attn_kernel, scale=float(scale), n_heads=n_heads,
                          has_bias=has_bias),
        out_shape=jax.ShapeDtypeStruct((B, L, D), jnp.bfloat16),
        grid=(B,),
        in_specs=in_specs,
        out_specs=pl.BlockSpec((None, L, D), lambda b: (b, 0, 0)),
        compiler_params=_cparams(("parallel",)),
    )(*args)


def cross_attention(q3d, kv3d, bias, *, n_heads, scale):
    """q3d: (B, Lq, D) bf16; kv3d: (B, Lk, 2D) bf16 packed [k|v]; bias or None."""
    B, Lq, D = q3d.shape
    Lk = kv3d.shape[1]
    has_bias = bias is not None
    in_specs = [pl.BlockSpec((None, Lq, D), lambda b: (b, 0, 0)),
                pl.BlockSpec((None, Lk, 2 * D), lambda b: (b, 0, 0))]
    args = [q3d, kv3d]
    if has_bias:
        in_specs.append(pl.BlockSpec((None, Lq, Lk), lambda b: (b, 0, 0)))
        args.append(bias)
    return pl.pallas_call(
        functools.partial(_cross_attn_kernel, scale=float(scale), n_heads=n_heads,
                          has_bias=has_bias),
        out_shape=jax.ShapeDtypeStruct((B, Lq, D), jnp.bfloat16),
        grid=(B,),
        in_specs=in_specs,
        out_specs=pl.BlockSpec((None, Lq, D), lambda b: (b, 0, 0)),
        compiler_params=_cparams(("parallel",)),
    )(*args)


# --------------------------------------------------------------------------- #
# Pure-JAX reference primitives (mirror the kernel numerics: bf16 operands,
# f32 accumulation, same -1e9 mask bias, same 1/sqrt(d_model) scale)
# --------------------------------------------------------------------------- #

def _ref_layernorm(x2d, g, b, eps, **_):
    return _layernorm_f32(x2d, g.reshape(1, -1), b.reshape(1, -1), eps)


def _ref_ln_linear(x2d, w, b, norm=None, *, eps=1e-6, **_):
    xop = x2d
    if norm is not None:
        xop = _layernorm_f32(x2d, norm[0].reshape(1, -1), norm[1].reshape(1, -1),
                             eps).astype(jnp.bfloat16)
    acc = jnp.dot(xop, w, preferred_element_type=jnp.float32) + b.reshape(1, -1)
    return acc.astype(jnp.bfloat16)


def _ref_proj_residual(x2d, res2d, w, b, **_):
    acc = jnp.dot(x2d, w, preferred_element_type=jnp.float32)
    return res2d.astype(jnp.float32) + acc + b.reshape(1, -1)


def _ref_ffn(x2d, norm, w1, b1, w2, b2, *, eps=1e-6, activation="relu", **_):
    h = _layernorm_f32(x2d, norm[0].reshape(1, -1), norm[1].reshape(1, -1),
                       eps).astype(jnp.bfloat16)
    a = jnp.dot(h, w1, preferred_element_type=jnp.float32) + b1.reshape(1, -1)
    a = jnp.maximum(a, 0.0) if activation == "relu" else jax.nn.gelu(a)
    out = jnp.dot(a.astype(jnp.bfloat16), w2, preferred_element_type=jnp.float32)
    return x2d.astype(jnp.float32) + out + b2.reshape(1, -1)


def _ref_attn(q, k, v, bias, n_heads, scale):
    B, Lq, D = q.shape
    Lk = k.shape[1]
    hd = D // n_heads
    q4 = q.reshape(B, Lq, n_heads, hd).transpose(0, 2, 1, 3)
    k4 = k.reshape(B, Lk, n_heads, hd).transpose(0, 2, 1, 3)
    v4 = v.reshape(B, Lk, n_heads, hd).transpose(0, 2, 1, 3)
    s = jnp.einsum("bhqd,bhkd->bhqk", q4, k4,
                   preferred_element_type=jnp.float32) * scale
    if bias is not None:
        s = s + bias[:, None, :, :]
    s = s - jnp.max(s, axis=-1, keepdims=True)
    p = jnp.exp(s)
    p = p / jnp.sum(p, axis=-1, keepdims=True)
    ctx = jnp.einsum("bhqk,bhkd->bhqd", p.astype(jnp.bfloat16), v4,
                     preferred_element_type=jnp.float32)
    return ctx.transpose(0, 2, 1, 3).reshape(B, Lq, D).astype(jnp.bfloat16)


def _ref_self_attn(qkv3d, bias, *, n_heads, scale):
    D = qkv3d.shape[-1] // 3
    return _ref_attn(qkv3d[..., :D], qkv3d[..., D:2 * D], qkv3d[..., 2 * D:],
                     bias, n_heads, scale)


def _ref_cross_attn(q3d, kv3d, bias, *, n_heads, scale):
    D = q3d.shape[-1]
    return _ref_attn(q3d, kv3d[..., :D], kv3d[..., D:], bias, n_heads, scale)


PALLAS_PRIMS = dict(ln_linear=ln_linear, proj_residual=proj_residual,
                    self_attn=self_attention, cross_attn=cross_attention,
                    ffn=ffn_residual, layernorm=layernorm)
REF_PRIMS = dict(ln_linear=_ref_ln_linear, proj_residual=_ref_proj_residual,
                 self_attn=_ref_self_attn, cross_attn=_ref_cross_attn,
                 ffn=_ref_ffn, layernorm=_ref_layernorm)


# --------------------------------------------------------------------------- #
# Decoder orchestration (shared between the Pallas and reference paths)
# --------------------------------------------------------------------------- #

def _mask_to_bias(mask, B, Lq, Lk):
    if mask is None:
        return None
    m = jnp.asarray(mask)
    if m.ndim == 2:
        m = m[None]
    # TODO(synk): torch masked_fill uses -inf; -1e9 avoids NaNs for fully-masked
    # rows and is equivalent through the softmax otherwise.
    bias = jnp.where(m == 0, -1e9, 0.0).astype(jnp.float32)
    return jnp.broadcast_to(bias, (B, Lq, Lk))


def _self_attn_block(prims, mp, norm, x2d, bias, B, L, n_heads, D, eps):
    qkv = prims["ln_linear"](x2d, mp["wqkv"], mp["bqkv"], norm, eps=eps)
    ctx = prims["self_attn"](qkv.reshape(B, L, 3 * D), bias,
                             n_heads=n_heads, scale=1.0 / math.sqrt(D))
    # NOTE: the PyTorch module scales by 1/sqrt(d_model), not 1/sqrt(head_dim).
    return prims["proj_residual"](ctx.reshape(B * L, D), x2d, mp["wo"], mp["bo"])


def _cross_attn_block(prims, mp, norm, x2d, enc2d, bias, B, Lt, Ls, n_heads, D, eps):
    q = prims["ln_linear"](x2d, mp["wq"], mp["bq"], norm, eps=eps)
    kv = prims["ln_linear"](enc2d, mp["wkv"], mp["bkv"], None, eps=eps)
    ctx = prims["cross_attn"](q.reshape(B, Lt, D), kv.reshape(B, Ls, 2 * D), bias,
                              n_heads=n_heads, scale=1.0 / math.sqrt(D))
    return prims["proj_residual"](ctx.reshape(B * Lt, D), x2d, mp["wo"], mp["bo"])


def _decoder_layer(prims, lp, x2d, enc2d, d_bias, e_bias, B, Lt, Ls, n_heads, D, eps):
    x2d = _self_attn_block(prims, lp["mha"], (lp["mha_norm_g"], lp["mha_norm_b"]),
                           x2d, d_bias, B, Lt, n_heads, D, eps)
    x2d = _cross_attn_block(prims, lp["ca"], (lp["ca_norm_g"], lp["ca_norm_b"]),
                            x2d, enc2d, e_bias, B, Lt, Ls, n_heads, D, eps)
    x2d = prims["ffn"](x2d, (lp["ff_norm_g"], lp["ff_norm_b"]),
                       lp["ff"]["w1"], lp["ff"]["b1"], lp["ff"]["w2"], lp["ff"]["b2"],
                       eps=eps)
    # Residual dropouts (p=0.1 in the torch defaults) are identity in eval mode.
    return x2d


def transformer_decoder_forward(prims, layers, final_norm, tgt, enc,
                                d_mask=None, e_mask=None, *, n_heads, eps=1e-6):
    B, Lt, D = tgt.shape
    Ls = enc.shape[1]
    d_bias = _mask_to_bias(d_mask, B, Lt, Lt)
    e_bias = _mask_to_bias(e_mask, B, Lt, Ls)
    x = tgt.reshape(B * Lt, D).astype(jnp.float32)       # f32 residual stream
    enc2d = enc.reshape(B * Ls, D).astype(jnp.bfloat16)  # matmul operand only
    for lp in layers:
        x = _decoder_layer(prims, lp, x, enc2d, d_bias, e_bias,
                           B, Lt, Ls, n_heads, D, eps)
    if final_norm is not None:
        x = prims["layernorm"](x, final_norm["g"], final_norm["b"], eps)
    return x.reshape(B, Lt, D)


# --------------------------------------------------------------------------- #
# Parameter init (weights stored (in, out) = transpose of nn.Linear, bf16 once)
# --------------------------------------------------------------------------- #

def _init_linear(key, fan_in, fan_out):
    kw, kb = jax.random.split(key)
    lim = 1.0 / math.sqrt(fan_in)
    w = jax.random.uniform(kw, (fan_in, fan_out), jnp.float32, -lim, lim)
    b = jax.random.uniform(kb, (fan_out,), jnp.float32, -lim, lim)
    return w.astype(jnp.bfloat16), b


def _init_self_mha(key, d_model):
    kq, kk, kv, ko = jax.random.split(key, 4)
    wq, bq = _init_linear(kq, d_model, d_model)
    wk, bk = _init_linear(kk, d_model, d_model)
    wv, bv = _init_linear(kv, d_model, d_model)
    wo, bo = _init_linear(ko, d_model, d_model)
    return dict(wqkv=jnp.concatenate([wq, wk, wv], axis=1),
                bqkv=jnp.concatenate([bq, bk, bv]),
                wo=wo, bo=bo)


def _init_cross_mha(key, d_model):
    kq, kk, kv, ko = jax.random.split(key, 4)
    wq, bq = _init_linear(kq, d_model, d_model)
    wk, bk = _init_linear(kk, d_model, d_model)
    wv, bv = _init_linear(kv, d_model, d_model)
    wo, bo = _init_linear(ko, d_model, d_model)
    return dict(wq=wq, bq=bq,
                wkv=jnp.concatenate([wk, wv], axis=1),
                bkv=jnp.concatenate([bk, bv]),
                wo=wo, bo=bo)


def _init_norm(key, d_model):
    kg, kb = jax.random.split(key)
    g = 1.0 + 0.02 * jax.random.normal(kg, (d_model,), jnp.float32)
    b = 0.02 * jax.random.normal(kb, (d_model,), jnp.float32)
    return g, b


def init_decoder_params(key, num_layers, d_model, dim_ff):
    layer_keys = jax.random.split(key, num_layers + 1)
    layers = []
    for lk in layer_keys[:-1]:
        k1, k2, k3, k4, k5, k6, k7 = jax.random.split(lk, 7)
        g1, n1 = _init_norm(k1, d_model)
        g2, n2 = _init_norm(k2, d_model)
        g3, n3 = _init_norm(k3, d_model)
        w1, b1 = _init_linear(k6, d_model, dim_ff)
        w2, b2 = _init_linear(k7, dim_ff, d_model)
        layers.append(dict(
            mha_norm_g=g1, mha_norm_b=n1, mha=_init_self_mha(k4, d_model),
            ca_norm_g=g2, ca_norm_b=n2, ca=_init_cross_mha(k5, d_model),
            ff_norm_g=g3, ff_norm_b=n3,
            ff=dict(w1=w1, b1=b1, w2=w2, b2=b2)))
    gf, bf = _init_norm(layer_keys[-1], d_model)
    return layers, dict(g=gf, b=bf)


if __name__ == "__main__":
    # Small shapes consistent with (bsz, seq_len, d_model).
    bsz, tgt_len, src_len = 2, 8, 16
    d_model, n_heads, dim_ff, num_layers = 128, 8, 256, 2

    key = jax.random.PRNGKey(0)
    k_tgt, k_enc, k_par = jax.random.split(key, 3)
    tgt = jax.random.normal(k_tgt, (bsz, tgt_len, d_model), jnp.float32)
    enc = jax.random.normal(k_enc, (bsz, src_len, d_model), jnp.float32)
    layers, final_norm = init_decoder_params(k_par, num_layers, d_model, dim_ff)

    # Causal decoder mask (1 = keep, 0 = masked); encoder mask left as None
    # (the kernel then omits the bias operand entirely).
    d_mask = jnp.broadcast_to(
        jnp.tril(jnp.ones((tgt_len, tgt_len), jnp.int32)), (bsz, tgt_len, tgt_len))

    out = transformer_decoder_forward(PALLAS_PRIMS, layers, final_norm,
                                      tgt, enc, d_mask, None, n_heads=n_heads)
    out = jax.block_until_ready(out)

    ref = transformer_decoder_forward(REF_PRIMS, layers, final_norm,
                                      tgt, enc, d_mask, None, n_heads=n_heads)
    ref = jax.block_until_ready(ref)

    assert out.shape == (bsz, tgt_len, d_model)
    err = float(jnp.max(jnp.abs(out - ref)))
    # bf16 MXU operands + approximate softmax reciprocal vs mirrored pure-JAX ref.
    assert err < 3e-2, f"max abs err {err}"

    print("KERNEL_OK")
</pallas_src>

<mosaic_0001>
module attributes {stable_mosaic.version = 11 : i64} {
  func.func @_ln_linear_kernel(%arg0: i32, %arg1: memref<16x128xf32, #tpu.memory_space<vmem>>, %arg2: memref<1x128xf32, #tpu.memory_space<vmem>>, %arg3: memref<1x128xf32, #tpu.memory_space<vmem>>, %arg4: memref<128x384xbf16, #tpu.memory_space<vmem>>, %arg5: memref<1x384xf32, #tpu.memory_space<vmem>>, %arg6: memref<16x384xbf16, #tpu.memory_space<vmem>>) attributes {dimension_semantics = [#tpu.dimension_semantics<parallel>], iteration_bounds = array<i64: 1>, scalar_prefetch = 0 : i64, scratch_operands = 0 : i64, tpu.core_type = #tpu.core_type<tc>, window_params = [{transform_indices = @transform_0, window_bounds = array<i64: 16, 128>}, {pipeline_mode = #tpu.pipeline_mode<synchronous>, transform_indices = @transform_1, window_bounds = array<i64: 1, 128>}, {pipeline_mode = #tpu.pipeline_mode<synchronous>, transform_indices = @transform_2, window_bounds = array<i64: 1, 128>}, {pipeline_mode = #tpu.pipeline_mode<synchronous>, transform_indices = @transform_3, window_bounds = array<i64: 128, 384>}, {pipeline_mode = #tpu.pipeline_mode<synchronous>, transform_indices = @transform_4, window_bounds = array<i64: 1, 384>}, {transform_indices = @transform_5, window_bounds = array<i64: 16, 384>}]} {
    %c0 = arith.constant 0 : index
    %c0_0 = arith.constant 0 : index
    %0 = vector.load %arg1[%c0, %c0_0] : memref<16x128xf32, #tpu.memory_space<vmem>>, vector<16x128xf32>
    %c0_1 = arith.constant 0 : index
    %c0_2 = arith.constant 0 : index
    %1 = vector.load %arg2[%c0_1, %c0_2] : memref<1x128xf32, #tpu.memory_space<vmem>>, vector<1x128xf32>
    %c0_3 = arith.constant 0 : index
    %c0_4 = arith.constant 0 : index
    %2 = vector.load %arg3[%c0_3, %c0_4] : memref<1x128xf32, #tpu.memory_space<vmem>>, vector<1x128xf32>
    %cst = arith.constant dense<0.000000e+00> : vector<16xf32>
    %3 = vector.multi_reduction <add>, %0, %cst [1] : vector<16x128xf32> to vector<16xf32>
    %4 = vector.shape_cast %3 : vector<16xf32> to vector<16x1xf32>
    %cst_5 = arith.constant 1.280000e+02 : f32
    %5 = vector.broadcast %cst_5 : f32 to vector<16x1xf32>
    %6 = arith.divf %4, %5 : vector<16x1xf32>
    %7 = vector.broadcast %6 : vector<16x1xf32> to vector<16x128xf32>
    %8 = arith.subf %0, %7 : vector<16x128xf32>
    %9 = arith.mulf %8, %8 : vector<16x128xf32>
    %cst_6 = arith.constant dense<0.000000e+00> : vector<16xf32>
    %10 = vector.multi_reduction <add>, %9, %cst_6 [1] : vector<16x128xf32> to vector<16xf32>
    %11 = vector.shape_cast %10 : vector<16xf32> to vector<16x1xf32>
    %cst_7 = arith.constant 1.280000e+02 : f32
    %12 = vector.broadcast %cst_7 : f32 to vector<16x1xf32>
    %13 = arith.divf %11, %12 : vector<16x1xf32>
    %cst_8 = arith.constant 9.99999997E-7 : f32
    %14 = vector.broadcast %cst_8 : f32 to vector<16x1xf32>
    %15 = arith.addf %13, %14 : vector<16x1xf32>
    %16 = math.rsqrt %15 : vector<16x1xf32>
    %17 = vector.broadcast %16 : vector<16x1xf32> to vector<16x128xf32>
    %18 = arith.mulf %8, %17 : vector<16x128xf32>
    %19 = vector.broadcast %1 : vector<1x128xf32> to vector<16x128xf32>
    %20 = arith.mulf %18, %19 : vector<16x128xf32>
    %21 = vector.broadcast %2 : vector<1x128xf32> to vector<16x128xf32>
    %22 = arith.addf %20, %21 : vector<16x128xf32>
    %23 = arith.truncf %22 : vector<16x128xf32> to vector<16x128xbf16>
    %c0_9 = arith.constant 0 : index
    %c0_10 = arith.constant 0 : index
    %24 = vector.load %arg4[%c0_9, %c0_10] : memref<128x384xbf16, #tpu.memory_space<vmem>>, vector<128x384xbf16>
    %cst_11 = arith.constant dense<0.000000e+00> : vector<16x384xf32>
    %25 = tpu.matmul %23, %24, %cst_11 {dimension_numbers = #tpu.dot_dimension_numbers<[1], [0], [0], [1], [0, 0, 1, 1], [], []>} : vector<16x128xbf16>, vector<128x384xbf16>, vector<16x384xf32> -> vector<16x384xf32>
    %c0_12 = arith.constant 0 : index
    %c0_13 = arith.constant 0 : index
    %26 = vector.load %arg5[%c0_12, %c0_13] : memref<1x384xf32, #tpu.memory_space<vmem>>, vector<1x384xf32>
    %27 = vector.broadcast %26 : vector<1x384xf32> to vector<16x384xf32>
    %28 = arith.addf %25, %27 : vector<16x384xf32>
    %29 = arith.truncf %28 : vector<16x384xf32> to vector<16x384xbf16>
    %c0_14 = arith.constant 0 : index
    %c0_15 = arith.constant 0 : index
    %30 = vector.load %arg6[%c0_14, %c0_15] : memref<16x384xbf16, #tpu.memory_space<vmem>>, vector<16x384xbf16>
    tpu.vector_store %arg6[%c0_14, %c0_15], %29 {strides = array<i32>} : memref<16x384xbf16, #tpu.memory_space<vmem>>, vector<16x384xbf16>,
    return
  }
  func.func @transform_0(%arg0: i32) -> (i32, i32) {
    %c0_i32 = arith.constant 0 : i32
    %c0_i32_0 = arith.constant 0 : i32
    return %arg0, %c0_i32 : i32, i32
  }
  func.func @transform_1(%arg0: i32) -> (i32, i32) {
    %c0_i32 = arith.constant 0 : i32
    %c0_i32_0 = arith.constant 0 : i32
    %c0_i32_1 = arith.constant 0 : i32
    return %c0_i32, %c0_i32_0 : i32, i32
  }
  func.func @transform_2(%arg0: i32) -> (i32, i32) {
    %c0_i32 = arith.constant 0 : i32
    %c0_i32_0 = arith.constant 0 : i32
    %c0_i32_1 = arith.constant 0 : i32
    return %c0_i32, %c0_i32_0 : i32, i32
  }
  func.func @transform_3(%arg0: i32) -> (i32, i32) {
    %c0_i32 = arith.constant 0 : i32
    %c0_i32_0 = arith.constant 0 : i32
    %c0_i32_1 = arith.constant 0 : i32
    return %c0_i32, %c0_i32_0 : i32, i32
  }
  func.func @transform_4(%arg0: i32) -> (i32, i32) {
    %c0_i32 = arith.constant 0 : i32
    %c0_i32_0 = arith.constant 0 : i32
    %c0_i32_1 = arith.constant 0 : i32
    return %c0_i32, %c0_i32_0 : i32, i32
  }
  func.func @transform_5(%arg0: i32) -> (i32, i32) {
    %c0_i32 = arith.constant 0 : i32
    %c0_i32_0 = arith.constant 0 : i32
    return %arg0, %c0_i32 : i32, i32
  }
}

</mosaic_0001>

<llo_original>
// kernel: tpu_custom_call.1
$region0: #{tpu_custom_call.1}
  #allocation0 [shape = 'u32[]', space=smem, size = 0x4, offset = 0x4, fixed_abs, tag = 'smem constant byte address 0x4 - core index']
  #allocation1 [shape = 'u32[144,128]{1,0:T(1,128)}', space=vmem, size = 0x12000, scoped, tag = 'internal scratch']
  %s0 = inlined_call_operand.hbm [shape: f32[16,128], index: 0, kind: input, shape index: {}]
  %s1 = inlined_call_operand.vmem [shape: f32[1,128], index: 1, kind: input, shape index: {}]
  %s2 = inlined_call_operand.vmem [shape: f32[1,128], index: 2, kind: input, shape index: {}]
  %s3 = inlined_call_operand.hbm [shape: bf16[128,384], index: 3, kind: input, shape index: {}]
  %s4 = inlined_call_operand.vmem [shape: f32[1,384], index: 4, kind: input, shape index: {}]
  %s5 = inlined_call_operand.hbm [shape: bf16[16,384], index: 5, kind: output, shape index: {}]
  %s6 = sld [smem:[#allocation0]]
  $region38: #{tpu_custom_call.1} parent=0
    _
  %s8 = ssub.s32 1, %s6
  %s9 = scalar_select 0, %s8, %s6
  $region1: #{tpu_custom_call.1} parent=0
    #allocation2 [shape = 'u8[8192]{0}', space=vmem, size = 0x2000, scoped, tag = 'input window, operand 0, single buffered']
    #allocation3 [shape = 's32[1]{0}', space=sflag, size = 0x4, scoped, tag = 'scoped memory for tpu_custom_call.1']
    #allocation4 [shape = 's32[1]{0}', space=sflag, size = 0x4, scoped, tag = 'scoped memory for tpu_custom_call.1']
    #allocation5 [shape = 'u8[98304]{0}', space=vmem, size = 0x18000, scoped, tag = 'input window, operand 3, single buffered']
    #allocation6 [shape = 's32[1]{0}', space=sflag, size = 0x4, scoped, tag = 'scoped memory for tpu_custom_call.1']
    #allocation7 [shape = 'u8[12288]{0}', space=vmem, size = 0x3000, scoped, tag = 'output window, operand 0, single buffered']
    %10 = vsyncpa [#allocation3], 0
    %11 = vsyncpa [#allocation6], 0
    %12 = vsyncpa [#allocation4], 0
    // Predicated region
    $region2: #{tpu_custom_call.1} parent=1 // pred_check
      _
    $region3: #{tpu_custom_call.1} parent=1 // pred_check_branch
      %14 = sbr.rel (0) target = $region5
    $region4: #{tpu_custom_call.1} parent=1 // pred_region
      %s16 = ssub.s32 256, 256
      %17 = vsyncadd [#allocation3], %s16
      %s18 = sshll.u32 [#allocation2], 4
      %s19 = int_to_ptr.vmem [resolvable:$true] %s18
      %24 = dma.hbm_to_vmem [thread:$0]  %s0, 256, %s19, [#allocation3], 128, 128, 8
    $region5: #{tpu_custom_call.1} parent=1 // pred_fallthru
      _
    // Predicated region
    $region6: #{tpu_custom_call.1} parent=1 // pred_check
      _
    $region7: #{tpu_custom_call.1} parent=1 // pred_check_branch
      %26 = sbr.rel (0) target = $region9
    $region8: #{tpu_custom_call.1} parent=1 // pred_region
      _
    $region9: #{tpu_custom_call.1} parent=1 // pred_fallthru
      _
    // Predicated region
    $region10: #{tpu_custom_call.1} parent=1 // pred_check
      _
    $region11: #{tpu_custom_call.1} parent=1 // pred_check_branch
      %28 = sbr.rel (0) target = $region13
    $region12: #{tpu_custom_call.1} parent=1 // pred_region
      _
    $region13: #{tpu_custom_call.1} parent=1 // pred_fallthru
      _
    // Predicated region
    $region14: #{tpu_custom_call.1} parent=1 // pred_check
      _
    $region15: #{tpu_custom_call.1} parent=1 // pred_check_branch
      %30 = sbr.rel (0) target = $region17
    $region16: #{tpu_custom_call.1} parent=1 // pred_region
      %s32 = ssub.s32 3072, 3072
      %33 = vsyncadd [#allocation6], %s32
      %s34 = sshll.u32 [#allocation5], 4
      %s35 = int_to_ptr.vmem [resolvable:$true] %s34
      %40 = dma.hbm_to_vmem [thread:$0]  %s3, 3072, %s35, [#allocation6], 192, 192, 12
    $region17: #{tpu_custom_call.1} parent=1 // pred_fallthru
      _
    // Predicated region
    $region18: #{tpu_custom_call.1} parent=1 // pred_check
      _
    $region19: #{tpu_custom_call.1} parent=1 // pred_check_branch
      %42 = sbr.rel (0) target = $region21
    $region20: #{tpu_custom_call.1} parent=1 // pred_region
      _
    $region21: #{tpu_custom_call.1} parent=1 // pred_fallthru
      _
    // Predicated region
    $region22: #{tpu_custom_call.1} parent=1 // pred_check
      _
    $region23: #{tpu_custom_call.1} parent=1 // pred_check_branch
      %44 = sbr.rel (0) target = $region25
    $region24: #{tpu_custom_call.1} parent=1 // pred_region
      %45 = dma.done [#allocation3], 256
    $region25: #{tpu_custom_call.1} parent=1 // pred_fallthru
      _
    // Predicated region
    $region26: #{tpu_custom_call.1} parent=1 // pred_check
      _
    $region27: #{tpu_custom_call.1} parent=1 // pred_check_branch
      %47 = sbr.rel (0) target = $region29
    $region28: #{tpu_custom_call.1} parent=1 // pred_region
      %48 = dma.done [#allocation6], 3072
    $region29: #{tpu_custom_call.1} parent=1 // pred_fallthru
      _
    %v50 = vld [vmem:[#allocation2] sm:$0xff]
    %v51 = vld [vmem:[#allocation2 + $0x8] sm:$0xff]
    %v52 = vld [vmem:[%s1] sm:$0x1]
    %v53 = vld [vmem:[%s2] sm:$0x1]
    %54 = vadd.xlane.f32.xlu0 %v50
    %v55 = vpop.xlane.xlu0 %54
    %56 = vadd.xlane.f32.xlu0 %v51
    %v57 = vpop.xlane.xlu0 %56
    %v58 = vrcp.pop 128.0
    %v59 = vmul.f32 %v55, %v58
    %v60 = vmul.f32 %v57, %v58
    %v61 = vsub.f32 %v50, %v59
    %v62 = vsub.f32 %v51, %v60
    %v63 = vmul.f32 %v61, %v61
    %v64 = vmul.f32 %v62, %v62
    %65 = vadd.xlane.f32.xlu0 %v63
    %v66 = vpop.xlane.xlu0 %65
    %67 = vadd.xlane.f32.xlu0 %v64
    %v68 = vpop.xlane.xlu0 %67
    %v69 = vmul.f32 %v66, %v58
    %v70 = vmul.f32 %v68, %v58
    %v71 = vadd.f32 %v69, 1e-06
    %v72 = vadd.f32 %v70, 1e-06
    %v73 = vrsqrt.pop %v71
    %v74 = vrsqrt.pop %v72
    %v75 = vmul.f32 %v61, %v73
    %v76 = vmul.f32 %v62, %v74
    %v78 = vlaneseq
    %v79 = vshrl.u32 %v78, 7
    %v80 = vsub.s32 0, %v79
    %v81 = vrot.slane %v52, %v80
    %v83 = vmul.f32 %v75, %v81
    %v84 = vmul.f32 %v76, %v81
    %v86 = vlaneseq
    %v87 = vshrl.u32 %v86, 7
    %v88 = vsub.s32 0, %v87
    %v89 = vrot.slane %v53, %v88
    %v91 = vadd.f32 %v83, %v89
    %v92 = vadd.f32 %v84, %v89
    %v93 = vpack.c.bf16 %v92, %v91
    %v94 = vld [vmem:[#allocation5] sm:$0xff]
    %v95 = vld [vmem:[#allocation5 + $0x8] sm:$0xf]
    %v96 = vld [vmem:[#allocation5 + $0xc] sm:$0xff]
    %v97 = vld [vmem:[#allocation5 + $0x14] sm:$0xf]
    %v98 = vld [vmem:[#allocation5 + $0x18] sm:$0xff]
    %v99 = vld [vmem:[#allocation5 + $0x20] sm:$0xf]
    %v100 = vld [vmem:[#allocation5 + $0x24] sm:$0xff]
    %v101 = vld [vmem:[#allocation5 + $0x2c] sm:$0xf]
    %v102 = vld [vmem:[#allocation5 + $0x30] sm:$0xff]
    %v103 = vld [vmem:[#allocation5 + $0x38] sm:$0xf]
    %v104 = vld [vmem:[#allocation5 + $0x3c] sm:$0xff]
    %v105 = vld [vmem:[#allocation5 + $0x44] sm:$0xf]
    %v106 = vld [vmem:[#allocation5 + $0x48] sm:$0xff]
    %v107 = vld [vmem:[#allocation5 + $0x50] sm:$0xf]
    %v108 = vld [vmem:[#allocation5 + $0x54] sm:$0xff]
    %v109 = vld [vmem:[#allocation5 + $0x5c] sm:$0xf]
    %v110 = vld [vmem:[#allocation5 + $0x60] sm:$0xff]
    %v111 = vld [vmem:[#allocation5 + $0x68] sm:$0xf]
    %v112 = vld [vmem:[#allocation5 + $0x6c] sm:$0xff]
    %v113 = vld [vmem:[#allocation5 + $0x74] sm:$0xf]
    %v114 = vld [vmem:[#allocation5 + $0x78] sm:$0xff]
    %v115 = vld [vmem:[#allocation5 + $0x80] sm:$0xf]
    %v116 = vld [vmem:[#allocation5 + $0x84] sm:$0xff]
    %v117 = vld [vmem:[#allocation5 + $0x8c] sm:$0xf]
    %v118 = vld [vmem:[#allocation5 + $0x90] sm:$0xff]
    %v119 = vld [vmem:[#allocation5 + $0x98] sm:$0xf]
    %v120 = vld [vmem:[#allocation5 + $0x9c] sm:$0xff]
    %v121 = vld [vmem:[#allocation5 + $0xa4] sm:$0xf]
    %v122 = vld [vmem:[#allocation5 + $0xa8] sm:$0xff]
    %v123 = vld [vmem:[#allocation5 + $0xb0] sm:$0xf]
    %v124 = vld [vmem:[#allocation5 + $0xb4] sm:$0xff]
    %v125 = vld [vmem:[#allocation5 + $0xbc] sm:$0xf]
    %v126 = vld [vmem:[%s4] sm:$0x7]
    %v128 = vlaneseq
    %v129 = vshrl.u32 %v128, 7
    %v130 = vsub.s32 0, %v129
    %v131 = vrot.slane %v126, %v130
    %v132 = vlaneseq
    %v133 = vshrl.u32 %v132, 7
    %v134 = vsub.s32 1, %v133
    %v135 = vrot.slane %v126, %v134
    %v136 = vlaneseq
    %v137 = vshrl.u32 %v136, 7
    %v138 = vsub.s32 2, %v137
    %v139 = vrot.slane %v126, %v138
    %v175 = vunpack.c.l.b16 %v94
    %v176 = vunpack.c.h.b16 %v94
    %v177 = vunpack.c.l.b16 %v95
    %v178 = vunpack.c.l.b16 %v96
    %v179 = vunpack.c.h.b16 %v96
    %v180 = vunpack.c.l.b16 %v97
    %v181 = vunpack.c.l.b16 %v98
    %v182 = vunpack.c.h.b16 %v98
    %v183 = vunpack.c.l.b16 %v99
    %v184 = vunpack.c.l.b16 %v100
    %v185 = vunpack.c.h.b16 %v100
    %v186 = vunpack.c.l.b16 %v101
    %v187 = vunpack.c.l.b16 %v102
    %v188 = vunpack.c.h.b16 %v102
    %v189 = vunpack.c.l.b16 %v103
    %v190 = vunpack.c.l.b16 %v104
    %v191 = vunpack.c.h.b16 %v104
    %v192 = vunpack.c.l.b16 %v105
    %v193 = vunpack.c.l.b16 %v106
    %v194 = vunpack.c.h.b16 %v106
    %v195 = vunpack.c.l.b16 %v107
    %v196 = vunpack.c.l.b16 %v108
    %v197 = vunpack.c.h.b16 %v108
    %v198 = vunpack.c.l.b16 %v109
    %v199 = vunpack.c.l.b16 %v110
    %v200 = vunpack.c.h.b16 %v110
    %v201 = vunpack.c.l.b16 %v111
    %v202 = vunpack.c.l.b16 %v112
    %v203 = vunpack.c.h.b16 %v112
    %v204 = vunpack.c.l.b16 %v113
    %v205 = vunpack.c.l.b16 %v114
    %v206 = vunpack.c.h.b16 %v114
    %v207 = vunpack.c.l.b16 %v115
    %v208 = vunpack.c.l.b16 %v116
    %v209 = vunpack.c.h.b16 %v116
    %v210 = vunpack.c.l.b16 %v117
    %v211 = vunpack.c.l.b16 %v118
    %v212 = vunpack.c.h.b16 %v118
    %v213 = vunpack.c.l.b16 %v119
    %v214 = vunpack.c.l.b16 %v120
    %v215 = vunpack.c.h.b16 %v120
    %v216 = vunpack.c.l.b16 %v121
    %v217 = vunpack.c.l.b16 %v122
    %v218 = vunpack.c.h.b16 %v122
    %v219 = vunpack.c.l.b16 %v123
    %v220 = vunpack.c.l.b16 %v124
    %v221 = vunpack.c.h.b16 %v124
    %v222 = vunpack.c.l.b16 %v125
    %v223 = vpack.c.b16 %v178, %v175
    %v224 = vpack.c.b16 %v179, %v176
    %v225 = vpack.c.b16 %v180, %v177
    %v226 = vpack.c.b16 %v184, %v181
    %v227 = vpack.c.b16 %v185, %v182
    %v228 = vpack.c.b16 %v186, %v183
    %v229 = vpack.c.b16 %v190, %v187
    %v230 = vpack.c.b16 %v191, %v188
    %v231 = vpack.c.b16 %v192, %v189
    %v232 = vpack.c.b16 %v196, %v193
    %v233 = vpack.c.b16 %v197, %v194
    %v234 = vpack.c.b16 %v198, %v195
    %v235 = vpack.c.b16 %v202, %v199
    %v236 = vpack.c.b16 %v203, %v200
    %v237 = vpack.c.b16 %v204, %v201
    %v238 = vpack.c.b16 %v208, %v205
    %v239 = vpack.c.b16 %v209, %v206
    %v240 = vpack.c.b16 %v210, %v207
    %v241 = vpack.c.b16 %v214, %v211
    %v242 = vpack.c.b16 %v215, %v212
    %v243 = vpack.c.b16 %v216, %v213
    %v244 = vpack.c.b16 %v220, %v217
    %v245 = vpack.c.b16 %v221, %v218
    %v246 = vpack.c.b16 %v222, %v219
    %271 = vmatprep.subr.bf16.mxu0 %v224
    %272 = vmatpush1.bf16.msra.mxu0 %v223
    %273 = vmatprep.subr.bf16.mxu0 %v227
    %274 = vmatpush1.bf16.msra.mxu0 %v226
    %275 = vmatprep.subr.bf16.mxu0 %v230
    %276 = vmatpush1.bf16.msra.mxu0 %v229
    %277 = vmatprep.subr.bf16.mxu0 %v233
    %278 = vmatpush1.bf16.msra.mxu0 %v232
    %279 = vmatprep.subr.bf16.mxu0 %v236
    %280 = vmatpush1.bf16.msra.mxu0 %v235
    %281 = vmatprep.subr.bf16.mxu0 %v239
    %282 = vmatpush1.bf16.msra.mxu0 %v238
    %283 = vmatprep.subr.bf16.mxu0 %v242
    %284 = vmatpush1.bf16.msra.mxu0 %v241
    %285 = vmatprep.subr.bf16.mxu0 %v245
    %286 = vmatpush1.bf16.msra.mxu0 %v244
    %287 = vmatprep.subr.bf16.mxu0 0
    %288 = vmatpush1.bf16.msra.mxu0 0
    %289 = vmatprep.subr.bf16.mxu0 0
    %290 = vmatpush1.bf16.msra.mxu0 0
    %291 = vmatprep.subr.bf16.mxu0 0
    %292 = vmatpush1.bf16.msra.mxu0 0
    %293 = vmatprep.subr.bf16.mxu0 0
    %294 = vmatpush1.bf16.msra.mxu0 0
    %295 = vmatprep.subr.bf16.mxu0 0
    %296 = vmatpush1.bf16.msra.mxu0 0
    %297 = vmatprep.subr.bf16.mxu0 0
    %298 = vmatpush1.bf16.msra.mxu0 0
    %299 = vmatprep.subr.bf16.mxu0 0
    %300 = vmatpush1.bf16.msra.mxu0 0
    %301 = vmatprep.subr.bf16.mxu0 0
    %302 = vmatpush1.bf16.msra.mxu0 0
    %303 = vmatprep.mubr.bf16.mxu0 0
    %304 = vmatmul.mubr.bf16.gmra.mrb[0].mxu0 %v93
    %v305 = vpop.f32.mrb[0].mxu0
    %v306 = vadd.f32 %v131, %v305
    %v307 = vpop.f32.mrb[0].mxu0
    %v308 = vadd.f32 %v135, %v307
    %v309 = vpop.f32.mrb[0].mxu0
    %v310 = vadd.f32 %v131, %v309
    %v311 = vpop.f32.mrb[0].mxu0
    %v312 = vadd.f32 %v135, %v311
    %313 = vdwg.mxu0
    %314 = vmatprep.subr.bf16.mxu0 0
    %315 = vmatpush1.bf16.msra.mxu0 %v225
    %316 = vmatprep.subr.bf16.mxu0 0
    %317 = vmatpush1.bf16.msra.mxu0 %v228
    %318 = vmatprep.subr.bf16.mxu0 0
    %319 = vmatpush1.bf16.msra.mxu0 %v231
    %320 = vmatprep.subr.bf16.mxu0 0
    %321 = vmatpush1.bf16.msra.mxu0 %v234
    %322 = vmatprep.subr.bf16.mxu0 0
    %323 = vmatpush1.bf16.msra.mxu0 %v237
    %324 = vmatprep.subr.bf16.mxu0 0
    %325 = vmatpush1.bf16.msra.mxu0 %v240
    %326 = vmatprep.subr.bf16.mxu0 0
    %327 = vmatpush1.bf16.msra.mxu0 %v243
    %328 = vmatprep.subr.bf16.mxu0 0
    %329 = vmatpush1.bf16.msra.mxu0 %v246
    %330 = vmatprep.subr.bf16.mxu0 0
    %331 = vmatpush1.bf16.msra.mxu0 0
    %332 = vmatprep.subr.bf16.mxu0 0
    %333 = vmatpush1.bf16.msra.mxu0 0
    %334 = vmatprep.subr.bf16.mxu0 0
    %335 = vmatpush1.bf16.msra.mxu0 0
    %336 = vmatprep.subr.bf16.mxu0 0
    %337 = vmatpush1.bf16.msra.mxu0 0
    %338 = vmatprep.subr.bf16.mxu0 0
    %339 = vmatpush1.bf16.msra.mxu0 0
    %340 = vmatprep.subr.bf16.mxu0 0
    %341 = vmatpush1.bf16.msra.mxu0 0
    %342 = vmatprep.subr.bf16.mxu0 0
    %343 = vmatpush1.bf16.msra.mxu0 0
    %344 = vmatprep.subr.bf16.mxu0 0
    %345 = vmatpush1.bf16.msra.mxu0 0
    %346 = vmatprep.mubr.bf16.mxu0 0
    %347 = vmatmul.mubr.bf16.gmra.mrb[0].mxu0 %v93
    %v348 = vpop.f32.mrb[0].mxu0
    %v349 = vadd.f32 %v139, %v348
    %v350 = vpop.f32.mrb[0].mxu0
    %v351 = vpop.f32.mrb[0].mxu0
    %v352 = vadd.f32 %v139, %v351
    %v353 = vpop.f32.mrb[0].mxu0
    %354 = vdwg.mxu0
    %v355 = vpack.c.bf16 %v310, %v306
    %v356 = vpack.c.bf16 %v312, %v308
    %v357 = vpack.c.bf16 %v352, %v349
    %v361 = vunpack.c.l.b16 %v355
    %v362 = vunpack.c.l.b16 %v356
    %v363 = vunpack.c.l.b16 %v357
    %v364 = vunpack.c.h.b16 %v355
    %v365 = vunpack.c.h.b16 %v356
    %v366 = vunpack.c.h.b16 %v357
    %v367 = vpack.c.b16 %v362, %v361
    %v368 = vpack.c.b16 %v363, %v363
    %v369 = vpack.c.b16 %v365, %v364
    %v370 = vpack.c.b16 %v366, %v366
    %375 = vst [vmem:[#allocation7] sm:$0xff] %v367
    %376 = vst [vmem:[#allocation7 + $0x8] sm:$0xf] %v368
    %377 = vst [vmem:[#allocation7 + $0xc] sm:$0xff] %v369
    %378 = vst [vmem:[#allocation7 + $0x14] sm:$0xf] %v370
    // Predicated region
    $region30: #{tpu_custom_call.1} parent=1 // pred_check
      _
    $region31: #{tpu_custom_call.1} parent=1 // pred_check_branch
      %380 = sbr.rel (0) target = $region33
    $region32: #{tpu_custom_call.1} parent=1 // pred_region
      %s382 = ssub.s32 384, 384
      %383 = vsyncadd [#allocation4], %s382
      %s384 = sshll.u32 [#allocation7], 4
      %s385 = int_to_ptr.vmem [resolvable:$true] %s384
      %390 = dma.vmem_to_hbm [thread:$0]  %s385, 384, %s5, [#allocation4], 192, 192, 12
    $region33: #{tpu_custom_call.1} parent=1 // pred_fallthru
      _
    // Predicated region
    $region34: #{tpu_custom_call.1} parent=1 // pred_check
      _
    $region35: #{tpu_custom_call.1} parent=1 // pred_check_branch
      %392 = sbr.rel (0) target = $region37
    $region36: #{tpu_custom_call.1} parent=1 // pred_region
      %393 = dma.done [#allocation4], 384
    $region37: #{tpu_custom_call.1} parent=1 // pred_fallthru
      _
    %394 = vsyncpa [#allocation3], 1
    %395 = vsyncpa [#allocation6], 1
    %396 = vsyncpa [#allocation4], 1

</llo_original>
